<compile_context>
chip_gen: v7x
topology: tpu7x:2x2x1
jax: 0.10.0
libtpu: 0.0.40
codegen_flags: <defaults>
</compile_context>

<pallas_src>
import math

import jax
import jax.numpy as jnp
from jax.experimental import pallas as pl
from jax.experimental.pallas import tpu as pltpu


def _make_mlp_kernel(n_inputs):
    """Fused 3-layer MLP kernel over one batch tile.

    refs layout: [x_0..x_{n-1}, w1_0..w1_{n-1}, b1, w2, b2, w3, b3, out]
    The first layer's concat is expressed as a sum of per-chunk matmuls.
    """

    def kernel(*refs):
        x_refs = refs[:n_inputs]
        w1_refs = refs[n_inputs:2 * n_inputs]
        b1_ref, w2_ref, b2_ref, w3_ref, b3_ref, o_ref = refs[2 * n_inputs:]

        # layer 1: sum_i x_i @ W1[chunk_i]  (== cat(x_i) @ W1), f32 accumulate
        h = jnp.dot(x_refs[0][...], w1_refs[0][...],
                    preferred_element_type=jnp.float32)
        for xr, wr in zip(x_refs[1:], w1_refs[1:]):
            h = h + jnp.dot(xr[...], wr[...],
                            preferred_element_type=jnp.float32)
        h = jnp.maximum(h + b1_ref[...], 0.0)

        # layer 2
        h = jnp.dot(h.astype(w2_ref.dtype), w2_ref[...],
                    preferred_element_type=jnp.float32) + b2_ref[...]
        h = jnp.maximum(h, 0.0)

        # layer 3 (no activation)
        out = jnp.dot(h.astype(w3_ref.dtype), w3_ref[...],
                      preferred_element_type=jnp.float32) + b3_ref[...]
        o_ref[...] = out.astype(o_ref.dtype)

    return kernel


def final_classifier_forward(x1, x2, x3, params, *, tb=512,
                             compute_dtype=jnp.float32):
    """Pallas forward pass.

    x1/x2/x3: (B, d_i) float32 (x2 may be None, then only x1 feeds the MLP,
    matching the PyTorch module's `else` branch). Returns (B, dim5) float32.
    `tb` is the batch tile cap; the batch is padded up to a multiple of the
    effective tile so any B works.
    """
    xs = [x1, x2, x3] if x2 is not None else [x1]
    B = int(xs[0].shape[0])

    w1, b1 = params["w_two_nodes"], params["b_two_nodes"]
    w2, b2 = params["w_last"], params["b_last"]
    w3, b3 = params["w_fc2"], params["b_fc2"]
    D4 = int(w1.shape[1])
    D5 = int(w3.shape[1])

    dims = [int(x.shape[1]) for x in xs]
    assert sum(dims) == int(w1.shape[0]), \
        "sum of input feature dims must match W_two_nodes input dim"

    # Slice first-layer weight into per-input chunks (fuses the concat).
    w1_parts, off = [], 0
    for d in dims:
        w1_parts.append(w1[off:off + d].astype(compute_dtype))
        off += d
    w2c = w2.astype(compute_dtype)
    w3c = w3.astype(compute_dtype)

    # Batch tile: as large as possible (weights are ~13 KB, activations tiny),
    # multiple of 8 (f32 sublane) or 16 (bf16 packing), independent of B.
    sub = 16 if compute_dtype == jnp.bfloat16 else 8
    tb_eff = min(int(tb), ((B + sub - 1) // sub) * sub)
    tb_eff = max(sub, (tb_eff // sub) * sub)
    n_tiles = pl.cdiv(B, tb_eff)
    B_pad = n_tiles * tb_eff
    if B_pad != B:
        xs = [jnp.pad(x, ((0, B_pad - B), (0, 0))) for x in xs]
    xs = [x.astype(compute_dtype) for x in xs]

    # Biases kept as (1, D) f32 so they broadcast over the batch tile in-kernel.
    b1_2d = b1.reshape(1, D4).astype(jnp.float32)
    b2_2d = b2.reshape(1, D4).astype(jnp.float32)
    b3_2d = b3.reshape(1, D5).astype(jnp.float32)

    n = len(xs)
    grid = (n_tiles,)

    in_specs = (
        [pl.BlockSpec((tb_eff, d), lambda i: (i, 0)) for d in dims]      # x tiles
        + [pl.BlockSpec((d, D4), lambda i: (0, 0)) for d in dims]        # W1 chunks
        + [pl.BlockSpec((1, D4), lambda i: (0, 0)),                      # b1
           pl.BlockSpec((D4, D4), lambda i: (0, 0)),                     # W2
           pl.BlockSpec((1, D4), lambda i: (0, 0)),                      # b2
           pl.BlockSpec((D4, D5), lambda i: (0, 0)),                     # W3
           pl.BlockSpec((1, D5), lambda i: (0, 0))]                      # b3
    )

    out = pl.pallas_call(
        _make_mlp_kernel(n),
        out_shape=jax.ShapeDtypeStruct((B_pad, D5), jnp.float32),
        grid_spec=pltpu.PrefetchScalarGridSpec(
            num_scalar_prefetch=0,
            grid=grid,
            in_specs=in_specs,
            out_specs=pl.BlockSpec((tb_eff, D5), lambda i: (i, 0)),
        ),
        compiler_params=pltpu.CompilerParams(
            dimension_semantics=("parallel",)),
    )(*xs, *w1_parts, b1_2d, w2c, b2_2d, w3c, b3_2d)

    return out[:B]


def init_params(key, dim1, dim2, dim3, dim4, dim5):
    """Parameter init mirroring the module: xavier-normal weights, PyTorch
    default uniform biases. Weights stored as (in, out) = torch weight^T."""
    d_in = dim1 + dim2 + dim3
    ks = jax.random.split(key, 6)

    def xavier_normal(k, fan_in, fan_out):
        std = math.sqrt(2.0 / (fan_in + fan_out))
        return std * jax.random.normal(k, (fan_in, fan_out), dtype=jnp.float32)

    def bias_uniform(k, fan_in, fan_out):
        bound = 1.0 / math.sqrt(fan_in)
        return jax.random.uniform(k, (fan_out,), dtype=jnp.float32,
                                  minval=-bound, maxval=bound)

    return {
        "w_two_nodes": xavier_normal(ks[0], d_in, dim4),
        "b_two_nodes": bias_uniform(ks[1], d_in, dim4),
        "w_last":      xavier_normal(ks[2], dim4, dim4),
        "b_last":      bias_uniform(ks[3], dim4, dim4),
        "w_fc2":       xavier_normal(ks[4], dim4, dim5),
        "b_fc2":       bias_uniform(ks[5], dim4, dim5),
    }


def _reference_forward(x1, x2, x3, params):
    """Plain-JAX reference matching the PyTorch forward."""
    f = jnp.concatenate([x1, x2, x3], axis=-1) if x2 is not None else x1
    h = jnp.maximum(f @ params["w_two_nodes"] + params["b_two_nodes"], 0.0)
    h = jnp.maximum(h @ params["w_last"] + params["b_last"], 0.0)
    return h @ params["w_fc2"] + params["b_fc2"]


if __name__ == "__main__":
    dim1, dim2, dim3, dim4, dim5 = 16, 16, 16, 32, 8

    key = jax.random.PRNGKey(0)
    k_p, k1, k2, k3, k4 = jax.random.split(key, 5)
    params = init_params(k_p, dim1, dim2, dim3, dim4, dim5)

    # --- small batch (single tile) ---
    batch = 8
    x1 = jax.random.normal(k1, (batch, dim1), dtype=jnp.float32)
    x2 = jax.random.normal(k2, (batch, dim2), dtype=jnp.float32)
    x3 = jax.random.normal(k3, (batch, dim3), dtype=jnp.float32)

    out = jax.block_until_ready(final_classifier_forward(x1, x2, x3, params))
    ref = _reference_forward(x1, x2, x3, params)
    assert out.shape == (batch, dim5)
    assert jnp.allclose(out, ref, atol=1e-5, rtol=1e-5)

    # --- ragged batch: exercises multi-tile grid + tail padding ---
    batch2 = 200
    y1 = jax.random.normal(k4, (batch2, dim1), dtype=jnp.float32)
    y2 = jax.random.normal(k1, (batch2, dim2), dtype=jnp.float32)
    y3 = jax.random.normal(k2, (batch2, dim3), dtype=jnp.float32)
    out2 = jax.block_until_ready(
        final_classifier_forward(y1, y2, y3, params, tb=64))
    ref2 = _reference_forward(y1, y2, y3, params)
    assert out2.shape == (batch2, dim5)
    assert jnp.allclose(out2, ref2, atol=1e-5, rtol=1e-5)

    # --- x2 is None branch (x1 already carries the full concatenated width) ---
    xfull = jnp.concatenate([x1, x2, x3], axis=-1)
    out3 = jax.block_until_ready(
        final_classifier_forward(xfull, None, None, params))
    ref3 = _reference_forward(xfull, None, None, params)
    assert jnp.allclose(out3, ref3, atol=1e-5, rtol=1e-5)

    print("KERNEL_OK")
</pallas_src>

<mosaic_0001>
module attributes {stable_mosaic.version = 11 : i64} {
  func.func @kernel(%arg0: i32, %arg1: memref<8x16xf32, #tpu.memory_space<vmem>>, %arg2: memref<8x16xf32, #tpu.memory_space<vmem>>, %arg3: memref<8x16xf32, #tpu.memory_space<vmem>>, %arg4: memref<16x32xf32, #tpu.memory_space<vmem>>, %arg5: memref<16x32xf32, #tpu.memory_space<vmem>>, %arg6: memref<16x32xf32, #tpu.memory_space<vmem>>, %arg7: memref<1x32xf32, #tpu.memory_space<vmem>>, %arg8: memref<32x32xf32, #tpu.memory_space<vmem>>, %arg9: memref<1x32xf32, #tpu.memory_space<vmem>>, %arg10: memref<32x8xf32, #tpu.memory_space<vmem>>, %arg11: memref<1x8xf32, #tpu.memory_space<vmem>>, %arg12: memref<8x8xf32, #tpu.memory_space<vmem>>) attributes {dimension_semantics = [#tpu.dimension_semantics<parallel>], iteration_bounds = array<i64: 1>, scalar_prefetch = 0 : i64, scratch_operands = 0 : i64, tpu.core_type = #tpu.core_type<tc>, window_params = [{transform_indices = @transform_0, window_bounds = array<i64: 8, 16>}, {transform_indices = @transform_1, window_bounds = array<i64: 8, 16>}, {transform_indices = @transform_2, window_bounds = array<i64: 8, 16>}, {pipeline_mode = #tpu.pipeline_mode<synchronous>, transform_indices = @transform_3, window_bounds = array<i64: 16, 32>}, {pipeline_mode = #tpu.pipeline_mode<synchronous>, transform_indices = @transform_4, window_bounds = array<i64: 16, 32>}, {pipeline_mode = #tpu.pipeline_mode<synchronous>, transform_indices = @transform_5, window_bounds = array<i64: 16, 32>}, {pipeline_mode = #tpu.pipeline_mode<synchronous>, transform_indices = @transform_6, window_bounds = array<i64: 1, 32>}, {pipeline_mode = #tpu.pipeline_mode<synchronous>, transform_indices = @transform_7, window_bounds = array<i64: 32, 32>}, {pipeline_mode = #tpu.pipeline_mode<synchronous>, transform_indices = @transform_8, window_bounds = array<i64: 1, 32>}, {pipeline_mode = #tpu.pipeline_mode<synchronous>, transform_indices = @transform_9, window_bounds = array<i64: 32, 8>}, {pipeline_mode = #tpu.pipeline_mode<synchronous>, transform_indices = @transform_10, window_bounds = array<i64: 1, 8>}, {transform_indices = @transform_11, window_bounds = array<i64: 8, 8>}]} {
    %c0 = arith.constant 0 : index
    %c0_0 = arith.constant 0 : index
    %0 = vector.load %arg1[%c0, %c0_0] : memref<8x16xf32, #tpu.memory_space<vmem>>, vector<8x16xf32>
    %c0_1 = arith.constant 0 : index
    %c0_2 = arith.constant 0 : index
    %1 = vector.load %arg4[%c0_1, %c0_2] : memref<16x32xf32, #tpu.memory_space<vmem>>, vector<16x32xf32>
    %cst = arith.constant dense<0.000000e+00> : vector<8x32xf32>
    %2 = tpu.matmul %0, %1, %cst {dimension_numbers = #tpu.dot_dimension_numbers<[1], [0], [0], [1], [0, 0, 1, 1], [], []>} : vector<8x16xf32>, vector<16x32xf32>, vector<8x32xf32> -> vector<8x32xf32>
    %c0_3 = arith.constant 0 : index
    %c0_4 = arith.constant 0 : index
    %3 = vector.load %arg2[%c0_3, %c0_4] : memref<8x16xf32, #tpu.memory_space<vmem>>, vector<8x16xf32>
    %c0_5 = arith.constant 0 : index
    %c0_6 = arith.constant 0 : index
    %4 = vector.load %arg5[%c0_5, %c0_6] : memref<16x32xf32, #tpu.memory_space<vmem>>, vector<16x32xf32>
    %cst_7 = arith.constant dense<0.000000e+00> : vector<8x32xf32>
    %5 = tpu.matmul %3, %4, %cst_7 {dimension_numbers = #tpu.dot_dimension_numbers<[1], [0], [0], [1], [0, 0, 1, 1], [], []>} : vector<8x16xf32>, vector<16x32xf32>, vector<8x32xf32> -> vector<8x32xf32>
    %6 = arith.addf %2, %5 : vector<8x32xf32>
    %c0_8 = arith.constant 0 : index
    %c0_9 = arith.constant 0 : index
    %7 = vector.load %arg3[%c0_8, %c0_9] : memref<8x16xf32, #tpu.memory_space<vmem>>, vector<8x16xf32>
    %c0_10 = arith.constant 0 : index
    %c0_11 = arith.constant 0 : index
    %8 = vector.load %arg6[%c0_10, %c0_11] : memref<16x32xf32, #tpu.memory_space<vmem>>, vector<16x32xf32>
    %cst_12 = arith.constant dense<0.000000e+00> : vector<8x32xf32>
    %9 = tpu.matmul %7, %8, %cst_12 {dimension_numbers = #tpu.dot_dimension_numbers<[1], [0], [0], [1], [0, 0, 1, 1], [], []>} : vector<8x16xf32>, vector<16x32xf32>, vector<8x32xf32> -> vector<8x32xf32>
    %10 = arith.addf %6, %9 : vector<8x32xf32>
    %c0_13 = arith.constant 0 : index
    %c0_14 = arith.constant 0 : index
    %11 = vector.load %arg7[%c0_13, %c0_14] : memref<1x32xf32, #tpu.memory_space<vmem>>, vector<1x32xf32>
    %12 = vector.broadcast %11 : vector<1x32xf32> to vector<8x32xf32>
    %13 = arith.addf %10, %12 : vector<8x32xf32>
    %cst_15 = arith.constant 0.000000e+00 : f32
    %14 = vector.broadcast %cst_15 : f32 to vector<8x32xf32>
    %15 = arith.maximumf %13, %14 : vector<8x32xf32>
    %c0_16 = arith.constant 0 : index
    %c0_17 = arith.constant 0 : index
    %16 = vector.load %arg8[%c0_16, %c0_17] : memref<32x32xf32, #tpu.memory_space<vmem>>, vector<32x32xf32>
    %cst_18 = arith.constant dense<0.000000e+00> : vector<8x32xf32>
    %17 = tpu.matmul %15, %16, %cst_18 {dimension_numbers = #tpu.dot_dimension_numbers<[1], [0], [0], [1], [0, 0, 1, 1], [], []>} : vector<8x32xf32>, vector<32x32xf32>, vector<8x32xf32> -> vector<8x32xf32>
    %c0_19 = arith.constant 0 : index
    %c0_20 = arith.constant 0 : index
    %18 = vector.load %arg9[%c0_19, %c0_20] : memref<1x32xf32, #tpu.memory_space<vmem>>, vector<1x32xf32>
    %19 = vector.broadcast %18 : vector<1x32xf32> to vector<8x32xf32>
    %20 = arith.addf %17, %19 : vector<8x32xf32>
    %cst_21 = arith.constant 0.000000e+00 : f32
    %21 = vector.broadcast %cst_21 : f32 to vector<8x32xf32>
    %22 = arith.maximumf %20, %21 : vector<8x32xf32>
    %c0_22 = arith.constant 0 : index
    %c0_23 = arith.constant 0 : index
    %23 = vector.load %arg10[%c0_22, %c0_23] : memref<32x8xf32, #tpu.memory_space<vmem>>, vector<32x8xf32>
    %cst_24 = arith.constant dense<0.000000e+00> : vector<8x8xf32>
    %24 = tpu.matmul %22, %23, %cst_24 {dimension_numbers = #tpu.dot_dimension_numbers<[1], [0], [0], [1], [0, 0, 1, 1], [], []>} : vector<8x32xf32>, vector<32x8xf32>, vector<8x8xf32> -> vector<8x8xf32>
    %c0_25 = arith.constant 0 : index
    %c0_26 = arith.constant 0 : index
    %25 = vector.load %arg11[%c0_25, %c0_26] : memref<1x8xf32, #tpu.memory_space<vmem>>, vector<1x8xf32>
    %26 = vector.broadcast %25 : vector<1x8xf32> to vector<8x8xf32>
    %27 = arith.addf %24, %26 : vector<8x8xf32>
    %c0_27 = arith.constant 0 : index
    %c0_28 = arith.constant 0 : index
    %28 = vector.load %arg12[%c0_27, %c0_28] : memref<8x8xf32, #tpu.memory_space<vmem>>, vector<8x8xf32>
    tpu.vector_store %arg12[%c0_27, %c0_28], %27 {strides = array<i32>} : memref<8x8xf32, #tpu.memory_space<vmem>>, vector<8x8xf32>,
    return
  }
  func.func @transform_0(%arg0: i32) -> (i32, i32) {
    %c0_i32 = arith.constant 0 : i32
    %c0_i32_0 = arith.constant 0 : i32
    return %arg0, %c0_i32 : i32, i32
  }
  func.func @transform_1(%arg0: i32) -> (i32, i32) {
    %c0_i32 = arith.constant 0 : i32
    %c0_i32_0 = arith.constant 0 : i32
    return %arg0, %c0_i32 : i32, i32
  }
  func.func @transform_2(%arg0: i32) -> (i32, i32) {
    %c0_i32 = arith.constant 0 : i32
    %c0_i32_0 = arith.constant 0 : i32
    return %arg0, %c0_i32 : i32, i32
  }
  func.func @transform_3(%arg0: i32) -> (i32, i32) {
    %c0_i32 = arith.constant 0 : i32
    %c0_i32_0 = arith.constant 0 : i32
    %c0_i32_1 = arith.constant 0 : i32
    return %c0_i32, %c0_i32_0 : i32, i32
  }
  func.func @transform_4(%arg0: i32) -> (i32, i32) {
    %c0_i32 = arith.constant 0 : i32
    %c0_i32_0 = arith.constant 0 : i32
    %c0_i32_1 = arith.constant 0 : i32
    return %c0_i32, %c0_i32_0 : i32, i32
  }
  func.func @transform_5(%arg0: i32) -> (i32, i32) {
    %c0_i32 = arith.constant 0 : i32
    %c0_i32_0 = arith.constant 0 : i32
    %c0_i32_1 = arith.constant 0 : i32
    return %c0_i32, %c0_i32_0 : i32, i32
  }
  func.func @transform_6(%arg0: i32) -> (i32, i32) {
    %c0_i32 = arith.constant 0 : i32
    %c0_i32_0 = arith.constant 0 : i32
    %c0_i32_1 = arith.constant 0 : i32
    return %c0_i32, %c0_i32_0 : i32, i32
  }
  func.func @transform_7(%arg0: i32) -> (i32, i32) {
    %c0_i32 = arith.constant 0 : i32
    %c0_i32_0 = arith.constant 0 : i32
    %c0_i32_1 = arith.constant 0 : i32
    return %c0_i32, %c0_i32_0 : i32, i32
  }
  func.func @transform_8(%arg0: i32) -> (i32, i32) {
    %c0_i32 = arith.constant 0 : i32
    %c0_i32_0 = arith.constant 0 : i32
    %c0_i32_1 = arith.constant 0 : i32
    return %c0_i32, %c0_i32_0 : i32, i32
  }
  func.func @transform_9(%arg0: i32) -> (i32, i32) {
    %c0_i32 = arith.constant 0 : i32
    %c0_i32_0 = arith.constant 0 : i32
    %c0_i32_1 = arith.constant 0 : i32
    return %c0_i32, %c0_i32_0 : i32, i32
  }
  func.func @transform_10(%arg0: i32) -> (i32, i32) {
    %c0_i32 = arith.constant 0 : i32
    %c0_i32_0 = arith.constant 0 : i32
    %c0_i32_1 = arith.constant 0 : i32
    return %c0_i32, %c0_i32_0 : i32, i32
  }
  func.func @transform_11(%arg0: i32) -> (i32, i32) {
    %c0_i32 = arith.constant 0 : i32
    %c0_i32_0 = arith.constant 0 : i32
    return %arg0, %c0_i32 : i32, i32
  }
}

</mosaic_0001>

<llo_original>
// kernel: tpu_custom_call.1
$region0: #{tpu_custom_call.1}
  #allocation0 [shape = 'u32[]', space=smem, size = 0x4, offset = 0x4, fixed_abs, tag = 'smem constant byte address 0x4 - core index']
  #allocation1 [shape = 'u32[144,128]{1,0:T(1,128)}', space=vmem, size = 0x12000, scoped, tag = 'internal scratch']
  %s0 = inlined_call_operand.vmem [shape: f32[8,16], index: 0, kind: input, shape index: {}]
  %s1 = inlined_call_operand.hbm [shape: f32[8,16], index: 1, kind: input, shape index: {}]
  %s2 = inlined_call_operand.hbm [shape: f32[8,16], index: 2, kind: input, shape index: {}]
  %s3 = inlined_call_operand.vmem [shape: f32[16,32], index: 3, kind: input, shape index: {}]
  %s4 = inlined_call_operand.hbm [shape: f32[16,32], index: 4, kind: input, shape index: {}]
  %s5 = inlined_call_operand.hbm [shape: f32[16,32], index: 5, kind: input, shape index: {}]
  %s6 = inlined_call_operand.vmem [shape: f32[1,32], index: 6, kind: input, shape index: {}]
  %s7 = inlined_call_operand.vmem [shape: f32[32,32], index: 7, kind: input, shape index: {}]
  %s8 = inlined_call_operand.vmem [shape: f32[1,32], index: 8, kind: input, shape index: {}]
  %s9 = inlined_call_operand.vmem [shape: f32[32,8], index: 9, kind: input, shape index: {}]
  %s10 = inlined_call_operand.vmem [shape: f32[1,8], index: 10, kind: input, shape index: {}]
  %s11 = inlined_call_operand.hbm [shape: f32[8,8], index: 11, kind: output, shape index: {}]
  %s12 = sld [smem:[#allocation0]]
  $region70: #{tpu_custom_call.1} parent=0
    _
  %s14 = ssub.s32 1, %s12
  %s15 = scalar_select 0, %s14, %s12
  $region1: #{tpu_custom_call.1} parent=0
    #allocation2 [shape = 'u8[4096]{0}', space=vmem, size = 0x1000, scoped, tag = 'input window, operand 1, single buffered']
    #allocation3 [shape = 's32[1]{0}', space=sflag, size = 0x4, scoped, tag = 'scoped memory for tpu_custom_call.1']
    #allocation4 [shape = 's32[1]{0}', space=sflag, size = 0x4, scoped, tag = 'scoped memory for tpu_custom_call.1']
    #allocation5 [shape = 'u8[4096]{0}', space=vmem, size = 0x1000, scoped, tag = 'input window, operand 2, single buffered']
    #allocation6 [shape = 's32[1]{0}', space=sflag, size = 0x4, scoped, tag = 'scoped memory for tpu_custom_call.1']
    #allocation7 [shape = 'u8[8192]{0}', space=vmem, size = 0x2000, scoped, tag = 'input window, operand 4, single buffered']
    #allocation8 [shape = 'u8[8192]{0}', space=vmem, size = 0x2000, scoped, tag = 'input window, operand 5, single buffered']
    #allocation9 [shape = 's32[1]{0}', space=sflag, size = 0x4, scoped, tag = 'scoped memory for tpu_custom_call.1']
    #allocation10 [shape = 'u8[4096]{0}', space=vmem, size = 0x1000, scoped, tag = 'output window, operand 0, single buffered']
    %16 = vsyncpa [#allocation3], 0
    %17 = vsyncpa [#allocation6], 0
    %18 = vsyncpa [#allocation9], 0
    %19 = vsyncpa [#allocation4], 0
    // Predicated region
    $region2: #{tpu_custom_call.1} parent=1 // pred_check
      _
    $region3: #{tpu_custom_call.1} parent=1 // pred_check_branch
      %21 = sbr.rel (0) target = $region5
    $region4: #{tpu_custom_call.1} parent=1 // pred_region
      _
    $region5: #{tpu_custom_call.1} parent=1 // pred_fallthru
      _
    // Predicated region
    $region6: #{tpu_custom_call.1} parent=1 // pred_check
      _
    $region7: #{tpu_custom_call.1} parent=1 // pred_check_branch
      %23 = sbr.rel (0) target = $region9
    $region8: #{tpu_custom_call.1} parent=1 // pred_region
      %s25 = ssub.s32 128, 128
      %26 = vsyncadd [#allocation3], %s25
      %s28 = sshll.u32 [#allocation2], 4
      %s29 = int_to_ptr.vmem [resolvable:$true] %s28
      %31 = dma.hbm_to_vmem [thread:$0]  %s1, 128, %s29, [#allocation3]
    $region9: #{tpu_custom_call.1} parent=1 // pred_fallthru
      _
    // Predicated region
    $region10: #{tpu_custom_call.1} parent=1 // pred_check
      _
    $region11: #{tpu_custom_call.1} parent=1 // pred_check_branch
      %33 = sbr.rel (0) target = $region13
    $region12: #{tpu_custom_call.1} parent=1 // pred_region
      %s35 = ssub.s32 128, 128
      %36 = vsyncadd [#allocation6], %s35
      %s38 = sshll.u32 [#allocation5], 4
      %s39 = int_to_ptr.vmem [resolvable:$true] %s38
      %41 = dma.hbm_to_vmem [thread:$0]  %s2, 128, %s39, [#allocation6]
    $region13: #{tpu_custom_call.1} parent=1 // pred_fallthru
      _
    // Predicated region
    $region14: #{tpu_custom_call.1} parent=1 // pred_check
      _
    $region15: #{tpu_custom_call.1} parent=1 // pred_check_branch
      %43 = sbr.rel (0) target = $region17
    $region16: #{tpu_custom_call.1} parent=1 // pred_region
      _
    $region17: #{tpu_custom_call.1} parent=1 // pred_fallthru
      _
    // Predicated region
    $region18: #{tpu_custom_call.1} parent=1 // pred_check
      _
    $region19: #{tpu_custom_call.1} parent=1 // pred_check_branch
      %45 = sbr.rel (0) target = $region21
    $region20: #{tpu_custom_call.1} parent=1 // pred_region
      %s47 = ssub.s32 256, 256
      %48 = vsyncadd [#allocation6], %s47
      %s49 = sshll.u32 [#allocation7], 4
      %s50 = int_to_ptr.vmem [resolvable:$true] %s49
      %55 = dma.hbm_to_vmem [thread:$0]  %s4, 256, %s50, [#allocation6], 128, 128, 8
    $region21: #{tpu_custom_call.1} parent=1 // pred_fallthru
      _
    // Predicated region
    $region22: #{tpu_custom_call.1} parent=1 // pred_check
      _
    $region23: #{tpu_custom_call.1} parent=1 // pred_check_branch
      %57 = sbr.rel (0) target = $region25
    $region24: #{tpu_custom_call.1} parent=1 // pred_region
      %s59 = ssub.s32 256, 256
      %60 = vsyncadd [#allocation9], %s59
      %s61 = sshll.u32 [#allocation8], 4
      %s62 = int_to_ptr.vmem [resolvable:$true] %s61
      %67 = dma.hbm_to_vmem [thread:$0]  %s5, 256, %s62, [#allocation9], 128, 128, 8
    $region25: #{tpu_custom_call.1} parent=1 // pred_fallthru
      _
    // Predicated region
    $region26: #{tpu_custom_call.1} parent=1 // pred_check
      _
    $region27: #{tpu_custom_call.1} parent=1 // pred_check_branch
      %69 = sbr.rel (0) target = $region29
    $region28: #{tpu_custom_call.1} parent=1 // pred_region
      _
    $region29: #{tpu_custom_call.1} parent=1 // pred_fallthru
      _
    // Predicated region
    $region30: #{tpu_custom_call.1} parent=1 // pred_check
      _
    $region31: #{tpu_custom_call.1} parent=1 // pred_check_branch
      %71 = sbr.rel (0) target = $region33
    $region32: #{tpu_custom_call.1} parent=1 // pred_region
      _
    $region33: #{tpu_custom_call.1} parent=1 // pred_fallthru
      _
    // Predicated region
    $region34: #{tpu_custom_call.1} parent=1 // pred_check
      _
    $region35: #{tpu_custom_call.1} parent=1 // pred_check_branch
      %73 = sbr.rel (0) target = $region37
    $region36: #{tpu_custom_call.1} parent=1 // pred_region
      _
    $region37: #{tpu_custom_call.1} parent=1 // pred_fallthru
      _
    // Predicated region
    $region38: #{tpu_custom_call.1} parent=1 // pred_check
      _
    $region39: #{tpu_custom_call.1} parent=1 // pred_check_branch
      %75 = sbr.rel (0) target = $region41
    $region40: #{tpu_custom_call.1} parent=1 // pred_region
      _
    $region41: #{tpu_custom_call.1} parent=1 // pred_fallthru
      _
    // Predicated region
    $region42: #{tpu_custom_call.1} parent=1 // pred_check
      _
    $region43: #{tpu_custom_call.1} parent=1 // pred_check_branch
      %77 = sbr.rel (0) target = $region45
    $region44: #{tpu_custom_call.1} parent=1 // pred_region
      _
    $region45: #{tpu_custom_call.1} parent=1 // pred_fallthru
      _
    // Predicated region
    $region46: #{tpu_custom_call.1} parent=1 // pred_check
      _
    $region47: #{tpu_custom_call.1} parent=1 // pred_check_branch
      %79 = sbr.rel (0) target = $region49
    $region48: #{tpu_custom_call.1} parent=1 // pred_region
      %80 = dma.done [#allocation3], 128
    $region49: #{tpu_custom_call.1} parent=1 // pred_fallthru
      _
    // Predicated region
    $region50: #{tpu_custom_call.1} parent=1 // pred_check
      _
    $region51: #{tpu_custom_call.1} parent=1 // pred_check_branch
      %82 = sbr.rel (0) target = $region53
    $region52: #{tpu_custom_call.1} parent=1 // pred_region
      %83 = dma.done [#allocation6], 128
    $region53: #{tpu_custom_call.1} parent=1 // pred_fallthru
      _
    // Predicated region
    $region54: #{tpu_custom_call.1} parent=1 // pred_check
      _
    $region55: #{tpu_custom_call.1} parent=1 // pred_check_branch
      %85 = sbr.rel (0) target = $region57
    $region56: #{tpu_custom_call.1} parent=1 // pred_region
      %86 = dma.done [#allocation6], 256
    $region57: #{tpu_custom_call.1} parent=1 // pred_fallthru
      _
    // Predicated region
    $region58: #{tpu_custom_call.1} parent=1 // pred_check
      _
    $region59: #{tpu_custom_call.1} parent=1 // pred_check_branch
      %88 = sbr.rel (0) target = $region61
    $region60: #{tpu_custom_call.1} parent=1 // pred_region
      %89 = dma.done [#allocation9], 256
    $region61: #{tpu_custom_call.1} parent=1 // pred_fallthru
      _
    %v90 = vld [vmem:[%s0] sm:$0xff]
    %v91 = vld [vmem:[%s3] sm:$0xff]
    %v92 = vld [vmem:[%s3 + $0x8] sm:$0xff]
    %v93 = vld [vmem:[#allocation2] sm:$0xff]
    %v94 = vld [vmem:[#allocation7] sm:$0xff]
    %v95 = vld [vmem:[#allocation7 + $0x8] sm:$0xff]
    %vm96 = vcmask 130048
    %v98 = vsel %vm96, %v93, 0
    %100 = vmatprep.subr.mxu0 0.0
    %101 = vmatpush1.msra.mxu0 %v94
    %102 = vmatprep.subr.mxu0 0.0
    %103 = vmatpush1.msra.mxu0 %v95
    %104 = vmatprep.subr.mxu0 0.0
    %105 = vmatpush1.msra.mxu0 0.0
    %106 = vmatprep.subr.mxu0 0.0
    %107 = vmatpush1.msra.mxu0 0.0
    %108 = vmatprep.subr.mxu0 0.0
    %109 = vmatpush1.msra.mxu0 0.0
    %110 = vmatprep.subr.mxu0 0.0
    %111 = vmatpush1.msra.mxu0 0.0
    %112 = vmatprep.subr.mxu0 0.0
    %113 = vmatpush1.msra.mxu0 0.0
    %114 = vmatprep.subr.mxu0 0.0
    %115 = vmatpush1.msra.mxu0 0.0
    %116 = vmatprep.subr.mxu0 0.0
    %117 = vmatpush1.msra.mxu0 0.0
    %118 = vmatprep.subr.mxu0 0.0
    %119 = vmatpush1.msra.mxu0 0.0
    %120 = vmatprep.subr.mxu0 0.0
    %121 = vmatpush1.msra.mxu0 0.0
    %122 = vmatprep.subr.mxu0 0.0
    %123 = vmatpush1.msra.mxu0 0.0
    %124 = vmatprep.subr.mxu0 0.0
    %125 = vmatpush1.msra.mxu0 0.0
    %126 = vmatprep.subr.mxu0 0.0
    %127 = vmatpush1.msra.mxu0 0.0
    %128 = vmatprep.subr.mxu0 0.0
    %129 = vmatpush1.msra.mxu0 0.0
    %130 = vmatprep.subr.mxu0 0.0
    %131 = vmatpush1.msra.mxu0 0.0
    %132 = vmatprep.subr.mxu0 0.0
    %133 = vmatpush1.msra.mxu0 0.0
    %134 = vmatprep.subr.mxu0 0.0
    %135 = vmatpush1.msra.mxu0 0.0
    %136 = vmatprep.subr.mxu0 0.0
    %137 = vmatpush1.msra.mxu0 0.0
    %138 = vmatprep.subr.mxu0 0.0
    %139 = vmatpush1.msra.mxu0 0.0
    %140 = vmatprep.subr.mxu0 0.0
    %141 = vmatpush1.msra.mxu0 0.0
    %142 = vmatprep.subr.mxu0 0.0
    %143 = vmatpush1.msra.mxu0 0.0
    %144 = vmatprep.subr.mxu0 0.0
    %145 = vmatpush1.msra.mxu0 0.0
    %146 = vmatprep.subr.mxu0 0.0
    %147 = vmatpush1.msra.mxu0 0.0
    %148 = vmatprep.subr.mxu0 0.0
    %149 = vmatpush1.msra.mxu0 0.0
    %150 = vmatprep.subr.mxu0 0.0
    %151 = vmatpush1.msra.mxu0 0.0
    %152 = vmatprep.subr.mxu0 0.0
    %153 = vmatpush1.msra.mxu0 0.0
    %154 = vmatprep.subr.mxu0 0.0
    %155 = vmatpush1.msra.mxu0 0.0
    %156 = vmatprep.subr.mxu0 0.0
    %157 = vmatpush1.msra.mxu0 0.0
    %158 = vmatprep.subr.mxu0 0.0
    %159 = vmatpush1.msra.mxu0 0.0
    %160 = vmatprep.subr.mxu0 0.0
    %161 = vmatpush1.msra.mxu0 0.0
    %162 = vmatprep.subr.mxu0 0.0
    %163 = vmatpush1.msra.mxu0 0.0
    %164 = vmatprep.mubr.f32.mxu0 0.0
    %165 = vmatmul.mubr.f32.gmra.mrb[0].mxu0 %v98
    %v166 = vpop.f32.mrb[0].mxu0
    %v167 = vadd.f32 0.0, %v166
    %v168 = vpop.f32.mrb[0].mxu0
    %169 = vdwg.mxu0
    %v171 = vsel %vm96, %v90, 0
    %173 = vmatprep.subr.mxu0 0.0
    %174 = vmatpush1.msra.mxu0 %v91
    %175 = vmatprep.subr.mxu0 0.0
    %176 = vmatpush1.msra.mxu0 %v92
    %177 = vmatprep.subr.mxu0 0.0
    %178 = vmatpush1.msra.mxu0 0.0
    %179 = vmatprep.subr.mxu0 0.0
    %180 = vmatpush1.msra.mxu0 0.0
    %181 = vmatprep.subr.mxu0 0.0
    %182 = vmatpush1.msra.mxu0 0.0
    %183 = vmatprep.subr.mxu0 0.0
    %184 = vmatpush1.msra.mxu0 0.0
    %185 = vmatprep.subr.mxu0 0.0
    %186 = vmatpush1.msra.mxu0 0.0
    %187 = vmatprep.subr.mxu0 0.0
    %188 = vmatpush1.msra.mxu0 0.0
    %189 = vmatprep.subr.mxu0 0.0
    %190 = vmatpush1.msra.mxu0 0.0
    %191 = vmatprep.subr.mxu0 0.0
    %192 = vmatpush1.msra.mxu0 0.0
    %193 = vmatprep.subr.mxu0 0.0
    %194 = vmatpush1.msra.mxu0 0.0
    %195 = vmatprep.subr.mxu0 0.0
    %196 = vmatpush1.msra.mxu0 0.0
    %197 = vmatprep.subr.mxu0 0.0
    %198 = vmatpush1.msra.mxu0 0.0
    %199 = vmatprep.subr.mxu0 0.0
    %200 = vmatpush1.msra.mxu0 0.0
    %201 = vmatprep.subr.mxu0 0.0
    %202 = vmatpush1.msra.mxu0 0.0
    %203 = vmatprep.subr.mxu0 0.0
    %204 = vmatpush1.msra.mxu0 0.0
    %205 = vmatprep.subr.mxu0 0.0
    %206 = vmatpush1.msra.mxu0 0.0
    %207 = vmatprep.subr.mxu0 0.0
    %208 = vmatpush1.msra.mxu0 0.0
    %209 = vmatprep.subr.mxu0 0.0
    %210 = vmatpush1.msra.mxu0 0.0
    %211 = vmatprep.subr.mxu0 0.0
    %212 = vmatpush1.msra.mxu0 0.0
    %213 = vmatprep.subr.mxu0 0.0
    %214 = vmatpush1.msra.mxu0 0.0
    %215 = vmatprep.subr.mxu0 0.0
    %216 = vmatpush1.msra.mxu0 0.0
    %217 = vmatprep.subr.mxu0 0.0
    %218 = vmatpush1.msra.mxu0 0.0
    %219 = vmatprep.subr.mxu0 0.0
    %220 = vmatpush1.msra.mxu0 0.0
    %221 = vmatprep.subr.mxu0 0.0
    %222 = vmatpush1.msra.mxu0 0.0
    %223 = vmatprep.subr.mxu0 0.0
    %224 = vmatpush1.msra.mxu0 0.0
    %225 = vmatprep.subr.mxu0 0.0
    %226 = vmatpush1.msra.mxu0 0.0
    %227 = vmatprep.subr.mxu0 0.0
    %228 = vmatpush1.msra.mxu0 0.0
    %229 = vmatprep.subr.mxu0 0.0
    %230 = vmatpush1.msra.mxu0 0.0
    %231 = vmatprep.subr.mxu0 0.0
    %232 = vmatpush1.msra.mxu0 0.0
    %233 = vmatprep.subr.mxu0 0.0
    %234 = vmatpush1.msra.mxu0 0.0
    %235 = vmatprep.subr.mxu0 0.0
    %236 = vmatpush1.msra.mxu0 0.0
    %237 = vmatprep.mubr.f32.mxu0 0.0
    %238 = vmatmul.mubr.f32.gmra.mrb[0].mxu0 %v171
    %v239 = vpop.f32.mrb[0].mxu0
    %v240 = vadd.f32 %v167, %v239
    %v241 = vpop.f32.mrb[0].mxu0
    %242 = vdwg.mxu0
    %v243 = vld [vmem:[#allocation5] sm:$0xff]
    %v244 = vld [vmem:[#allocation8] sm:$0xff]
    %v245 = vld [vmem:[#allocation8 + $0x8] sm:$0xff]
    %v247 = vsel %vm96, %v243, 0
    %249 = vmatprep.subr.mxu0 0.0
    %250 = vmatpush1.msra.mxu0 %v244
    %251 = vmatprep.subr.mxu0 0.0
    %252 = vmatpush1.msra.mxu0 %v245
    %253 = vmatprep.subr.mxu0 0.0
    %254 = vmatpush1.msra.mxu0 0.0
    %255 = vmatprep.subr.mxu0 0.0
    %256 = vmatpush1.msra.mxu0 0.0
    %257 = vmatprep.subr.mxu0 0.0
    %258 = vmatpush1.msra.mxu0 0.0
    %259 = vmatprep.subr.mxu0 0.0
    %260 = vmatpush1.msra.mxu0 0.0
    %261 = vmatprep.subr.mxu0 0.0
    %262 = vmatpush1.msra.mxu0 0.0
    %263 = vmatprep.subr.mxu0 0.0
    %264 = vmatpush1.msra.mxu0 0.0
    %265 = vmatprep.subr.mxu0 0.0
    %266 = vmatpush1.msra.mxu0 0.0
    %267 = vmatprep.subr.mxu0 0.0
    %268 = vmatpush1.msra.mxu0 0.0
    %269 = vmatprep.subr.mxu0 0.0
    %270 = vmatpush1.msra.mxu0 0.0
    %271 = vmatprep.subr.mxu0 0.0
    %272 = vmatpush1.msra.mxu0 0.0
    %273 = vmatprep.subr.mxu0 0.0
    %274 = vmatpush1.msra.mxu0 0.0
    %275 = vmatprep.subr.mxu0 0.0
    %276 = vmatpush1.msra.mxu0 0.0
    %277 = vmatprep.subr.mxu0 0.0
    %278 = vmatpush1.msra.mxu0 0.0
    %279 = vmatprep.subr.mxu0 0.0
    %280 = vmatpush1.msra.mxu0 0.0
    %281 = vmatprep.subr.mxu0 0.0
    %282 = vmatpush1.msra.mxu0 0.0
    %283 = vmatprep.subr.mxu0 0.0
    %284 = vmatpush1.msra.mxu0 0.0
    %285 = vmatprep.subr.mxu0 0.0
    %286 = vmatpush1.msra.mxu0 0.0
    %287 = vmatprep.subr.mxu0 0.0
    %288 = vmatpush1.msra.mxu0 0.0
    %289 = vmatprep.subr.mxu0 0.0
    %290 = vmatpush1.msra.mxu0 0.0
    %291 = vmatprep.subr.mxu0 0.0
    %292 = vmatpush1.msra.mxu0 0.0
    %293 = vmatprep.subr.mxu0 0.0
    %294 = vmatpush1.msra.mxu0 0.0
    %295 = vmatprep.subr.mxu0 0.0
    %296 = vmatpush1.msra.mxu0 0.0
    %297 = vmatprep.subr.mxu0 0.0
    %298 = vmatpush1.msra.mxu0 0.0
    %299 = vmatprep.subr.mxu0 0.0
    %300 = vmatpush1.msra.mxu0 0.0
    %301 = vmatprep.subr.mxu0 0.0
    %302 = vmatpush1.msra.mxu0 0.0
    %303 = vmatprep.subr.mxu0 0.0
    %304 = vmatpush1.msra.mxu0 0.0
    %305 = vmatprep.subr.mxu0 0.0
    %306 = vmatpush1.msra.mxu0 0.0
    %307 = vmatprep.subr.mxu0 0.0
    %308 = vmatpush1.msra.mxu0 0.0
    %309 = vmatprep.subr.mxu0 0.0
    %310 = vmatpush1.msra.mxu0 0.0
    %311 = vmatprep.subr.mxu0 0.0
    %312 = vmatpush1.msra.mxu0 0.0
    %313 = vmatprep.mubr.f32.mxu0 0.0
    %314 = vmatmul.mubr.f32.gmra.mrb[0].mxu0 %v247
    %v315 = vpop.f32.mrb[0].mxu0
    %v316 = vadd.f32 0.0, %v315
    %v317 = vpop.f32.mrb[0].mxu0
    %318 = vdwg.mxu0
    %v319 = vadd.f32 %v240, %v316
    %v320 = vld [vmem:[%s6] sm:$0x1]
    %v322 = vlaneseq
    %v323 = vshrl.u32 %v322, 7
    %v324 = vsub.s32 0, %v323
    %v325 = vrot.slane %v320, %v324
    %v327 = vadd.f32 %v319, %v325
    %v328 = vmax.f32 %v327, 0.0
    %v329 = vld [vmem:[%s7] sm:$0xff]
    %v330 = vld [vmem:[%s7 + $0x8] sm:$0xff]
    %v331 = vld [vmem:[%s7 + $0x10] sm:$0xff]
    %v332 = vld [vmem:[%s7 + $0x18] sm:$0xff]
    %v333 = vld [vmem:[%s8] sm:$0x1]
    %v335 = vlaneseq
    %v336 = vshrl.u32 %v335, 7
    %v337 = vsub.s32 0, %v336
    %v338 = vrot.slane %v333, %v337
    %vm340 = vcmask 261120
    %v342 = vsel %vm340, %v328, 0
    %344 = vmatprep.subr.mxu0 0.0
    %345 = vmatpush1.msra.mxu0 %v329
    %346 = vmatprep.subr.mxu0 0.0
    %347 = vmatpush1.msra.mxu0 %v330
    %348 = vmatprep.subr.mxu0 0.0
    %349 = vmatpush1.msra.mxu0 %v331
    %350 = vmatprep.subr.mxu0 0.0
    %351 = vmatpush1.msra.mxu0 %v332
    %352 = vmatprep.subr.mxu0 0.0
    %353 = vmatpush1.msra.mxu0 0.0
    %354 = vmatprep.subr.mxu0 0.0
    %355 = vmatpush1.msra.mxu0 0.0
    %356 = vmatprep.subr.mxu0 0.0
    %357 = vmatpush1.msra.mxu0 0.0
    %358 = vmatprep.subr.mxu0 0.0
    %359 = vmatpush1.msra.mxu0 0.0
    %360 = vmatprep.subr.mxu0 0.0
    %361 = vmatpush1.msra.mxu0 0.0
    %362 = vmatprep.subr.mxu0 0.0
    %363 = vmatpush1.msra.mxu0 0.0
    %364 = vmatprep.subr.mxu0 0.0
    %365 = vmatpush1.msra.mxu0 0.0
    %366 = vmatprep.subr.mxu0 0.0
    %367 = vmatpush1.msra.mxu0 0.0
    %368 = vmatprep.subr.mxu0 0.0
    %369 = vmatpush1.msra.mxu0 0.0
    %370 = vmatprep.subr.mxu0 0.0
    %371 = vmatpush1.msra.mxu0 0.0
    %372 = vmatprep.subr.mxu0 0.0
    %373 = vmatpush1.msra.mxu0 0.0
    %374 = vmatprep.subr.mxu0 0.0
    %375 = vmatpush1.msra.mxu0 0.0
    %376 = vmatprep.subr.mxu0 0.0
    %377 = vmatpush1.msra.mxu0 0.0
    %378 = vmatprep.subr.mxu0 0.0
    %379 = vmatpush1.msra.mxu0 0.0
    %380 = vmatprep.subr.mxu0 0.0
    %381 = vmatpush1.msra.mxu0 0.0
    %382 = vmatprep.subr.mxu0 0.0
    %383 = vmatpush1.msra.mxu0 0.0
    %384 = vmatprep.subr.mxu0 0.0
    %385 = vmatpush1.msra.mxu0 0.0
    %386 = vmatprep.subr.mxu0 0.0
    %387 = vmatpush1.msra.mxu0 0.0
    %388 = vmatprep.subr.mxu0 0.0
    %389 = vmatpush1.msra.mxu0 0.0
    %390 = vmatprep.subr.mxu0 0.0
    %391 = vmatpush1.msra.mxu0 0.0
    %392 = vmatprep.subr.mxu0 0.0
    %393 = vmatpush1.msra.mxu0 0.0
    %394 = vmatprep.subr.mxu0 0.0
    %395 = vmatpush1.msra.mxu0 0.0
    %396 = vmatprep.subr.mxu0 0.0
    %397 = vmatpush1.msra.mxu0 0.0
    %398 = vmatprep.subr.mxu0 0.0
    %399 = vmatpush1.msra.mxu0 0.0
    %400 = vmatprep.subr.mxu0 0.0
    %401 = vmatpush1.msra.mxu0 0.0
    %402 = vmatprep.subr.mxu0 0.0
    %403 = vmatpush1.msra.mxu0 0.0
    %404 = vmatprep.subr.mxu0 0.0
    %405 = vmatpush1.msra.mxu0 0.0
    %406 = vmatprep.subr.mxu0 0.0
    %407 = vmatpush1.msra.mxu0 0.0
    %408 = vmatprep.mubr.f32.mxu0 0.0
    %409 = vmatmul.mubr.f32.gmra.mrb[0].mxu0 %v342
    %v410 = vpop.f32.mrb[0].mxu0
    %v411 = vadd.f32 %v338, %v410
    %v412 = vpop.f32.mrb[0].mxu0
    %413 = vdwg.mxu0
    %v414 = vmax.f32 %v411, 0.0
    %v415 = vld [vmem:[%s9] sm:$0xff]
    %v416 = vld [vmem:[%s9 + $0x8] sm:$0xff]
    %v417 = vld [vmem:[%s9 + $0x10] sm:$0xff]
    %v418 = vld [vmem:[%s9 + $0x18] sm:$0xff]
    %v419 = vld [vmem:[%s10] sm:$0x1]
    %v421 = vlaneseq
    %v422 = vshrl.u32 %v421, 7
    %v423 = vsub.s32 0, %v422
    %v424 = vrot.slane %v419, %v423
    %v427 = vsel %vm340, %v414, 0
    %429 = vmatprep.subr.mxu0 0.0
    %430 = vmatpush1.msra.mxu0 %v415
    %431 = vmatprep.subr.mxu0 0.0
    %432 = vmatpush1.msra.mxu0 %v416
    %433 = vmatprep.subr.mxu0 0.0
    %434 = vmatpush1.msra.mxu0 %v417
    %435 = vmatprep.subr.mxu0 0.0
    %436 = vmatpush1.msra.mxu0 %v418
    %437 = vmatprep.subr.mxu0 0.0
    %438 = vmatpush1.msra.mxu0 0.0
    %439 = vmatprep.subr.mxu0 0.0
    %440 = vmatpush1.msra.mxu0 0.0
    %441 = vmatprep.subr.mxu0 0.0
    %442 = vmatpush1.msra.mxu0 0.0
    %443 = vmatprep.subr.mxu0 0.0
    %444 = vmatpush1.msra.mxu0 0.0
    %445 = vmatprep.subr.mxu0 0.0
    %446 = vmatpush1.msra.mxu0 0.0
    %447 = vmatprep.subr.mxu0 0.0
    %448 = vmatpush1.msra.mxu0 0.0
    %449 = vmatprep.subr.mxu0 0.0
    %450 = vmatpush1.msra.mxu0 0.0
    %451 = vmatprep.subr.mxu0 0.0
    %452 = vmatpush1.msra.mxu0 0.0
    %453 = vmatprep.subr.mxu0 0.0
    %454 = vmatpush1.msra.mxu0 0.0
    %455 = vmatprep.subr.mxu0 0.0
    %456 = vmatpush1.msra.mxu0 0.0
    %457 = vmatprep.subr.mxu0 0.0
    %458 = vmatpush1.msra.mxu0 0.0
    %459 = vmatprep.subr.mxu0 0.0
    %460 = vmatpush1.msra.mxu0 0.0
    %461 = vmatprep.subr.mxu0 0.0
    %462 = vmatpush1.msra.mxu0 0.0
    %463 = vmatprep.subr.mxu0 0.0
    %464 = vmatpush1.msra.mxu0 0.0
    %465 = vmatprep.subr.mxu0 0.0
    %466 = vmatpush1.msra.mxu0 0.0
    %467 = vmatprep.subr.mxu0 0.0
    %468 = vmatpush1.msra.mxu0 0.0
    %469 = vmatprep.subr.mxu0 0.0
    %470 = vmatpush1.msra.mxu0 0.0
    %471 = vmatprep.subr.mxu0 0.0
    %472 = vmatpush1.msra.mxu0 0.0
    %473 = vmatprep.subr.mxu0 0.0
    %474 = vmatpush1.msra.mxu0 0.0
    %475 = vmatprep.subr.mxu0 0.0
    %476 = vmatpush1.msra.mxu0 0.0
    %477 = vmatprep.subr.mxu0 0.0
    %478 = vmatpush1.msra.mxu0 0.0
    %479 = vmatprep.subr.mxu0 0.0
    %480 = vmatpush1.msra.mxu0 0.0
    %481 = vmatprep.subr.mxu0 0.0
    %482 = vmatpush1.msra.mxu0 0.0
    %483 = vmatprep.subr.mxu0 0.0
    %484 = vmatpush1.msra.mxu0 0.0
    %485 = vmatprep.subr.mxu0 0.0
    %486 = vmatpush1.msra.mxu0 0.0
    %487 = vmatprep.subr.mxu0 0.0
    %488 = vmatpush1.msra.mxu0 0.0
    %489 = vmatprep.subr.mxu0 0.0
    %490 = vmatpush1.msra.mxu0 0.0
    %491 = vmatprep.subr.mxu0 0.0
    %492 = vmatpush1.msra.mxu0 0.0
    %493 = vmatprep.mubr.f32.mxu0 0.0
    %494 = vmatmul.mubr.f32.gmra.mrb[0].mxu0 %v427
    %v495 = vpop.f32.mrb[0].mxu0
    %v496 = vadd.f32 %v424, %v495
    %v497 = vpop.f32.mrb[0].mxu0
    %498 = vdwg.mxu0
    %vm499 = vcmask 64512
    %500 = vst.msk [vmem:[#allocation10] sm:$0xff] %vm499, %v496
    // Predicated region
    $region62: #{tpu_custom_call.1} parent=1 // pred_check
      _
    $region63: #{tpu_custom_call.1} parent=1 // pred_check_branch
      %502 = sbr.rel (0) target = $region65
    $region64: #{tpu_custom_call.1} parent=1 // pred_region
      %s504 = ssub.s32 128, 128
      %505 = vsyncadd [#allocation4], %s504
      %s507 = sshll.u32 [#allocation10], 4
      %s508 = int_to_ptr.vmem [resolvable:$true] %s507
      %510 = dma.vmem_to_hbm [thread:$0]  %s508, 128, %s11, [#allocation4]
    $region65: #{tpu_custom_call.1} parent=1 // pred_fallthru
      _
    // Predicated region
    $region66: #{tpu_custom_call.1} parent=1 // pred_check
      _
    $region67: #{tpu_custom_call.1} parent=1 // pred_check_branch
      %512 = sbr.rel (0) target = $region69
    $region68: #{tpu_custom_call.1} parent=1 // pred_region
      %513 = dma.done [#allocation4], 128
    $region69: #{tpu_custom_call.1} parent=1 // pred_fallthru
      _
    %514 = vsyncpa [#allocation3], 1
    %515 = vsyncpa [#allocation6], 1
    %516 = vsyncpa [#allocation9], 1
    %517 = vsyncpa [#allocation4], 1

</llo_original>
